<compile_context>
chip_gen: v7x
topology: tpu7x:2x2x1
jax: 0.10.0
libtpu: 0.0.40
codegen_flags: <defaults>
</compile_context>

<pallas_src>
import functools

import jax
import jax.numpy as jnp
from jax import lax
from jax.experimental import pallas as pl
from jax.experimental.pallas import tpu as pltpu

LANES = 128
SUBLANES = 8
MAX_ROW_TILE = 4096          # 4096 x 128 x 4B = 2 MiB per input tile
N_PARTIALS = 3               # sum(t), sum(bce), sum(t*bce)


def _edge_partial_kernel(p_ref, t_ref, out_ref, acc_ref, *,
                         rows, row_tile, n_inner, need_mask, binary_targets):
    j = pl.program_id(1)

    @pl.when(j == 0)
    def _():
        acc_ref[...] = jnp.zeros_like(acc_ref)

    # Upcast in-body so bf16 inputs can stay bf16 in HBM (half the bytes).
    p = p_ref[...].astype(jnp.float32)
    t = t_ref[...].astype(jnp.float32)

    if need_mask:
        # Rows past `rows` (ragged last block, or the duplicated clamped block of an
        # uneven megacore split) contain garbage in VMEM -- zero them before any math.
        # p=0, t=0 contributes exactly 0 to all three partial sums (log(0) is clamped
        # before the 0* multiply, so no NaN).
        logical_block = pl.program_id(0) * n_inner + j
        row_start = logical_block * row_tile
        row_ids = row_start + lax.broadcasted_iota(jnp.int32, (row_tile, LANES), 0)
        valid = row_ids < rows
        p = jnp.where(valid, p, 0.0)
        t = jnp.where(valid, t, 0.0)

    if binary_targets:
        # Single log per element (halves EUP work); exact for t in {0, 1}.
        bce = -jnp.maximum(jnp.log(jnp.where(t >= 0.5, p, 1.0 - p)), -100.0)
    else:
        # PyTorch F.binary_cross_entropy clamps each log term at -100.
        log_p = jnp.maximum(jnp.log(p), -100.0)
        log_1mp = jnp.maximum(jnp.log(1.0 - p), -100.0)
        bce = -(t * log_p + (1.0 - t) * log_1mp)

    # Deferred sublane reduce: collapse only the "groups of 8 rows" axis (pure VPU
    # vreg adds); keep vreg-shaped partials. Final 8->1/lane reduce is in the wrapper.
    if row_tile % SUBLANES == 0:
        gsum = lambda x: jnp.sum(x.reshape(-1, SUBLANES, LANES), axis=0)   # (8,128)
    else:
        # Rare single-block path (row_tile == rows, rows % 8 != 0): tiny full reduce.
        gsum = lambda x: jnp.sum(x, axis=0, keepdims=True)                 # (1,128)

    acc_ref[0] += gsum(t)
    acc_ref[1] += gsum(bce)
    acc_ref[2] += gsum(t * bce)

    @pl.when(j == pl.num_programs(1) - 1)
    def _():
        out_ref[0] = acc_ref[...]


def edge_loss(pred, target, *, max_row_tile=MAX_ROW_TILE, binary_targets=False):
    """EdgeLoss forward (mode='normal'). pred/target: any shape, pred in (0,1)."""
    assert pred.shape == target.shape
    n_total = int(pred.size)
    assert n_total > 0
    assert max_row_tile >= SUBLANES

    p_flat = pred.reshape(-1)
    t_flat = target.reshape(-1)

    rows = -(-n_total // LANES)                  # ceil(n / 128)
    if rows * LANES != n_total:
        # Only numel not a multiple of 128 still needs a (small) host-side pad so the
        # layout-preserving reshape to (rows, 128) is possible. p=0, t=0 padding
        # contributes exactly 0 to all three partial sums.
        pad = rows * LANES - n_total
        p_flat = jnp.pad(p_flat, (0, pad))
        t_flat = jnp.pad(t_flat, (0, pad))
    p2d = p_flat.reshape(rows, LANES)            # free, row-major reshape (no copy)
    t2d = t_flat.reshape(rows, LANES)

    if rows <= max_row_tile:
        row_tile = rows                          # single block == full row extent
    else:
        row_tile = max(SUBLANES, (max_row_tile // SUBLANES) * SUBLANES)
    blocks = -(-rows // row_tile)
    split = 2 if blocks >= 2 else 1              # leading 'parallel' axis -> both v7x TCs
    n_inner = -(-blocks // split)
    need_mask = (split * n_inner * row_tile) != rows
    acc_rows = SUBLANES if row_tile % SUBLANES == 0 else 1

    kernel = functools.partial(
        _edge_partial_kernel,
        rows=rows, row_tile=row_tile, n_inner=n_inner,
        need_mask=need_mask, binary_targets=binary_targets)

    # Clamp the block index so the duplicated steps of an uneven megacore split DMA
    # in-bounds data; their contribution is masked to zero inside the kernel.
    in_spec = pl.BlockSpec(
        (row_tile, LANES),
        lambda i, j: (jnp.minimum(i * n_inner + j, blocks - 1), 0))
    # TODO(synk): on v7x, add pipeline_mode=pl.Buffered(3) here if an xprof trace
    # still shows exposed DMA gaps between the 2 MiB steps.
    out_spec = pl.BlockSpec((1, N_PARTIALS, acc_rows, LANES),
                            lambda i, j: (i, 0, 0, 0))

    in_bytes = n_total * (pred.dtype.itemsize + target.dtype.itemsize)
    cost = pl.CostEstimate(
        flops=10 * n_total,
        transcendentals=(1 if binary_targets else 2) * n_total,
        bytes_accessed=in_bytes + split * N_PARTIALS * acc_rows * LANES * 4)

    partials = pl.pallas_call(
        kernel,
        out_shape=jax.ShapeDtypeStruct((split, N_PARTIALS, acc_rows, LANES),
                                       jnp.float32),
        grid=(split, n_inner),
        in_specs=[in_spec, in_spec],
        out_specs=out_spec,
        scratch_shapes=[pltpu.VMEM((N_PARTIALS, acc_rows, LANES), jnp.float32)],
        compiler_params=pltpu.CompilerParams(
            dimension_semantics=("parallel", "arbitrary")),
        cost_estimate=cost,
    )(p2d, t2d)

    # Tiny final reduction + scalar glue in plain JAX.
    sums = jnp.sum(partials, axis=(0, 2, 3))     # (3,): sum_t, sum_bce, sum_tbce
    sum_t, sum_bce, sum_tbce = sums[0], sums[1], sums[2]
    n = jnp.float32(n_total)
    beta = 1.0 - sum_t / n
    loss_sum = (1.0 - beta) * sum_bce + (2.0 * beta - 1.0) * sum_tbce
    return loss_sum / n


def _edge_loss_ref(pred, target):
    """Pure-JAX reference mirroring the PyTorch module (mode='normal')."""
    pred = pred.astype(jnp.float32)
    target = target.astype(jnp.float32)
    beta = 1.0 - jnp.mean(target)
    w = 1.0 - beta + (2.0 * beta - 1.0) * target
    log_p = jnp.maximum(jnp.log(pred), -100.0)
    log_1mp = jnp.maximum(jnp.log(1.0 - pred), -100.0)
    return jnp.mean(-w * (target * log_p + (1.0 - target) * log_1mp))


if __name__ == "__main__":
    key = jax.random.PRNGKey(0)
    k1, k2, k3, k4, k5, k6 = jax.random.split(key, 6)

    # 1) Aligned NCHW case (2*4*16*16 = 2048 elements, multiple of 128 -> no pad copy).
    shape1 = (2, 4, 16, 16)
    pred1 = jax.nn.sigmoid(jax.random.normal(k1, shape1, jnp.float32))
    targ1 = (jax.random.uniform(k2, shape1, jnp.float32) > 0.5).astype(jnp.float32)
    loss1 = jax.block_until_ready(edge_loss(pred1, targ1))
    ref1 = _edge_loss_ref(pred1, targ1)
    assert jnp.allclose(loss1, ref1, rtol=1e-5, atol=1e-6), (loss1, ref1)

    # 1b) Same data through the single-log binary-targets fast path.
    loss1b = jax.block_until_ready(edge_loss(pred1, targ1, binary_targets=True))
    assert jnp.allclose(loss1b, ref1, rtol=1e-5, atol=1e-6), (loss1b, ref1)

    # 2) Ragged numel (765, not a multiple of 128): minimal-pad path + rows % 8 != 0.
    shape2 = (1, 3, 15, 17)
    pred2 = jax.nn.sigmoid(jax.random.normal(k3, shape2, jnp.float32))
    targ2 = (jax.random.uniform(k4, shape2, jnp.float32) > 0.5).astype(jnp.float32)
    loss2 = jax.block_until_ready(edge_loss(pred2, targ2))
    ref2 = _edge_loss_ref(pred2, targ2)
    assert jnp.allclose(loss2, ref2, rtol=1e-5, atol=1e-6), (loss2, ref2)

    # 3) Force the multi-block megacore split + in-kernel row-mask path with a tiny
    #    tile: rows=24, row_tile=8 -> blocks=3, split=2, one fully-masked dup block.
    shape3 = (2, 4, 24, 16)
    pred3 = jax.nn.sigmoid(jax.random.normal(k5, shape3, jnp.float32))
    targ3 = (jax.random.uniform(k6, shape3, jnp.float32) > 0.5).astype(jnp.float32)
    loss3 = jax.block_until_ready(edge_loss(pred3, targ3, max_row_tile=8))
    ref3 = _edge_loss_ref(pred3, targ3)
    assert jnp.allclose(loss3, ref3, rtol=1e-5, atol=1e-6), (loss3, ref3)

    print("KERNEL_OK")
</pallas_src>

<mosaic_0001>
module attributes {stable_mosaic.version = 11 : i64} {
  func.func @_edge_partial_kernel(%arg0: i32, %arg1: i32, %arg2: memref<16x128xf32, #tpu.memory_space<vmem>>, %arg3: memref<16x128xf32, #tpu.memory_space<vmem>>, %arg4: memref<1x3x8x128xf32, #tpu.memory_space<vmem>>, %arg5: memref<3x8x128xf32, #tpu.memory_space<vmem>>) attributes {dimension_semantics = [#tpu.dimension_semantics<parallel>, #tpu.dimension_semantics<arbitrary>], iteration_bounds = array<i64: 1, 1>, scalar_prefetch = 0 : i64, scratch_operands = 1 : i64, tpu.core_type = #tpu.core_type<tc>, window_params = [{transform_indices = @transform_0, window_bounds = array<i64: 16, 128>}, {transform_indices = @transform_1, window_bounds = array<i64: 16, 128>}, {transform_indices = @transform_2, window_bounds = array<i64: 1, 3, 8, 128>}]} {
    %c0_i32 = arith.constant 0 : i32
    %0 = arith.cmpi eq, %arg1, %c0_i32 : i32
    %1 = arith.extui %0 : i1 to i32
    %c0_i32_0 = arith.constant 0 : i32
    %2 = arith.cmpi ne, %1, %c0_i32_0 : i32
    scf.if %2 {
      %cst_29 = arith.constant 0.000000e+00 : f32
      %48 = vector.broadcast %cst_29 : f32 to vector<3x8x128xf32>
      %c0_30 = arith.constant 0 : index
      %c0_31 = arith.constant 0 : index
      %c0_32 = arith.constant 0 : index
      %49 = vector.load %arg5[%c0_30, %c0_31, %c0_32] : memref<3x8x128xf32, #tpu.memory_space<vmem>>, vector<3x8x128xf32>
      tpu.vector_store %arg5[%c0_30, %c0_31, %c0_32], %48 {strides = array<i32>} : memref<3x8x128xf32, #tpu.memory_space<vmem>>, vector<3x8x128xf32>,
    } else {
    }
    %c0 = arith.constant 0 : index
    %c0_1 = arith.constant 0 : index
    %3 = vector.load %arg2[%c0, %c0_1] : memref<16x128xf32, #tpu.memory_space<vmem>>, vector<16x128xf32>
    %c0_2 = arith.constant 0 : index
    %c0_3 = arith.constant 0 : index
    %4 = vector.load %arg3[%c0_2, %c0_3] : memref<16x128xf32, #tpu.memory_space<vmem>>, vector<16x128xf32>
    %5 = math.log %3 : vector<16x128xf32>
    %cst = arith.constant -1.000000e+02 : f32
    %6 = vector.broadcast %cst : f32 to vector<16x128xf32>
    %7 = arith.maximumf %5, %6 : vector<16x128xf32>
    %cst_4 = arith.constant 1.000000e+00 : f32
    %8 = vector.broadcast %cst_4 : f32 to vector<16x128xf32>
    %9 = arith.subf %8, %3 : vector<16x128xf32>
    %10 = math.log %9 : vector<16x128xf32>
    %cst_5 = arith.constant -1.000000e+02 : f32
    %11 = vector.broadcast %cst_5 : f32 to vector<16x128xf32>
    %12 = arith.maximumf %10, %11 : vector<16x128xf32>
    %13 = arith.mulf %4, %7 : vector<16x128xf32>
    %cst_6 = arith.constant 1.000000e+00 : f32
    %14 = vector.broadcast %cst_6 : f32 to vector<16x128xf32>
    %15 = arith.subf %14, %4 : vector<16x128xf32>
    %16 = arith.mulf %15, %12 : vector<16x128xf32>
    %17 = arith.addf %13, %16 : vector<16x128xf32>
    %cst_7 = arith.constant 0.000000e+00 : f32
    %18 = vector.broadcast %cst_7 : f32 to vector<16x128xf32>
    %19 = arith.subf %18, %17 : vector<16x128xf32>
    %c0_8 = arith.constant 0 : index
    %c0_9 = arith.constant 0 : index
    %c0_10 = arith.constant 0 : index
    %20 = vector.load %arg5[%c0_8, %c0_9, %c0_10] : memref<3x8x128xf32, #tpu.memory_space<vmem>>, vector<1x8x128xf32>
    %21 = vector.shape_cast %20 : vector<1x8x128xf32> to vector<8x128xf32>
    %22 = vector.shape_cast %4 : vector<16x128xf32> to vector<2x8x128xf32>
    %cst_11 = arith.constant dense<0.000000e+00> : vector<8x128xf32>
    %23 = vector.multi_reduction <add>, %22, %cst_11 [0] : vector<2x8x128xf32> to vector<8x128xf32>
    %24 = arith.addf %21, %23 : vector<8x128xf32>
    %c0_12 = arith.constant 0 : index
    %c0_13 = arith.constant 0 : index
    %c0_14 = arith.constant 0 : index
    %25 = vector.load %arg5[%c0_12, %c0_13, %c0_14] : memref<3x8x128xf32, #tpu.memory_space<vmem>>, vector<1x8x128xf32>
    %26 = vector.shape_cast %25 : vector<1x8x128xf32> to vector<8x128xf32>
    %27 = vector.shape_cast %24 : vector<8x128xf32> to vector<1x8x128xf32>
    tpu.vector_store %arg5[%c0_12, %c0_13, %c0_14], %27 {strides = array<i32>} : memref<3x8x128xf32, #tpu.memory_space<vmem>>, vector<1x8x128xf32>,
    %c1 = arith.constant 1 : index
    %c0_15 = arith.constant 0 : index
    %c0_16 = arith.constant 0 : index
    %28 = vector.load %arg5[%c1, %c0_15, %c0_16] : memref<3x8x128xf32, #tpu.memory_space<vmem>>, vector<1x8x128xf32>
    %29 = vector.shape_cast %28 : vector<1x8x128xf32> to vector<8x128xf32>
    %30 = vector.shape_cast %19 : vector<16x128xf32> to vector<2x8x128xf32>
    %cst_17 = arith.constant dense<0.000000e+00> : vector<8x128xf32>
    %31 = vector.multi_reduction <add>, %30, %cst_17 [0] : vector<2x8x128xf32> to vector<8x128xf32>
    %32 = arith.addf %29, %31 : vector<8x128xf32>
    %c1_18 = arith.constant 1 : index
    %c0_19 = arith.constant 0 : index
    %c0_20 = arith.constant 0 : index
    %33 = vector.load %arg5[%c1_18, %c0_19, %c0_20] : memref<3x8x128xf32, #tpu.memory_space<vmem>>, vector<1x8x128xf32>
    %34 = vector.shape_cast %33 : vector<1x8x128xf32> to vector<8x128xf32>
    %35 = vector.shape_cast %32 : vector<8x128xf32> to vector<1x8x128xf32>
    tpu.vector_store %arg5[%c1_18, %c0_19, %c0_20], %35 {strides = array<i32>} : memref<3x8x128xf32, #tpu.memory_space<vmem>>, vector<1x8x128xf32>,
    %c2 = arith.constant 2 : index
    %c0_21 = arith.constant 0 : index
    %c0_22 = arith.constant 0 : index
    %36 = vector.load %arg5[%c2, %c0_21, %c0_22] : memref<3x8x128xf32, #tpu.memory_space<vmem>>, vector<1x8x128xf32>
    %37 = vector.shape_cast %36 : vector<1x8x128xf32> to vector<8x128xf32>
    %38 = arith.mulf %4, %19 : vector<16x128xf32>
    %39 = vector.shape_cast %38 : vector<16x128xf32> to vector<2x8x128xf32>
    %cst_23 = arith.constant dense<0.000000e+00> : vector<8x128xf32>
    %40 = vector.multi_reduction <add>, %39, %cst_23 [0] : vector<2x8x128xf32> to vector<8x128xf32>
    %41 = arith.addf %37, %40 : vector<8x128xf32>
    %c2_24 = arith.constant 2 : index
    %c0_25 = arith.constant 0 : index
    %c0_26 = arith.constant 0 : index
    %42 = vector.load %arg5[%c2_24, %c0_25, %c0_26] : memref<3x8x128xf32, #tpu.memory_space<vmem>>, vector<1x8x128xf32>
    %43 = vector.shape_cast %42 : vector<1x8x128xf32> to vector<8x128xf32>
    %44 = vector.shape_cast %41 : vector<8x128xf32> to vector<1x8x128xf32>
    tpu.vector_store %arg5[%c2_24, %c0_25, %c0_26], %44 {strides = array<i32>} : memref<3x8x128xf32, #tpu.memory_space<vmem>>, vector<1x8x128xf32>,
    %c0_i32_27 = arith.constant 0 : i32
    %45 = arith.cmpi eq, %arg1, %c0_i32_27 : i32
    %46 = arith.extui %45 : i1 to i32
    %c0_i32_28 = arith.constant 0 : i32
    %47 = arith.cmpi ne, %46, %c0_i32_28 : i32
    scf.if %47 {
      %c0_29 = arith.constant 0 : index
      %c0_30 = arith.constant 0 : index
      %c0_31 = arith.constant 0 : index
      %48 = vector.load %arg5[%c0_29, %c0_30, %c0_31] : memref<3x8x128xf32, #tpu.memory_space<vmem>>, vector<3x8x128xf32>
      %c0_32 = arith.constant 0 : index
      %c0_33 = arith.constant 0 : index
      %c0_34 = arith.constant 0 : index
      %c0_35 = arith.constant 0 : index
      %49 = vector.load %arg4[%c0_32, %c0_33, %c0_34, %c0_35] : memref<1x3x8x128xf32, #tpu.memory_space<vmem>>, vector<1x3x8x128xf32>
      %50 = vector.shape_cast %49 : vector<1x3x8x128xf32> to vector<3x8x128xf32>
      %51 = vector.shape_cast %48 : vector<3x8x128xf32> to vector<1x3x8x128xf32>
      tpu.vector_store %arg4[%c0_32, %c0_33, %c0_34, %c0_35], %51 {strides = array<i32>} : memref<1x3x8x128xf32, #tpu.memory_space<vmem>>, vector<1x3x8x128xf32>,
    } else {
    }
    return
  }
  func.func @transform_0(%arg0: i32, %arg1: i32) -> (i32, i32) {
    %c1_i32 = arith.constant 1 : i32
    %0 = arith.muli %arg0, %c1_i32 : i32
    %1 = arith.addi %0, %arg1 : i32
    %c0_i32 = arith.constant 0 : i32
    %2 = arith.minsi %1, %c0_i32 : i32
    %c0_i32_0 = arith.constant 0 : i32
    %c0_i32_1 = arith.constant 0 : i32
    return %2, %c0_i32_0 : i32, i32
  }
  func.func @transform_1(%arg0: i32, %arg1: i32) -> (i32, i32) {
    %c1_i32 = arith.constant 1 : i32
    %0 = arith.muli %arg0, %c1_i32 : i32
    %1 = arith.addi %0, %arg1 : i32
    %c0_i32 = arith.constant 0 : i32
    %2 = arith.minsi %1, %c0_i32 : i32
    %c0_i32_0 = arith.constant 0 : i32
    %c0_i32_1 = arith.constant 0 : i32
    return %2, %c0_i32_0 : i32, i32
  }
  func.func @transform_2(%arg0: i32, %arg1: i32) -> (i32, i32, i32, i32) {
    %c0_i32 = arith.constant 0 : i32
    %c0_i32_0 = arith.constant 0 : i32
    %c0_i32_1 = arith.constant 0 : i32
    %c0_i32_2 = arith.constant 0 : i32
    return %arg0, %c0_i32, %c0_i32_0, %c0_i32_1 : i32, i32, i32, i32
  }
}

</mosaic_0001>

<llo_original>
// kernel: tpu_custom_call.1
$region0: #{tpu_custom_call.1}
  #allocation0 [shape = 'u32[]', space=smem, size = 0x4, offset = 0x4, fixed_abs, tag = 'smem constant byte address 0x4 - core index']
  #allocation1 [shape = 'u32[144,128]{1,0:T(1,128)}', space=vmem, size = 0x12000, scoped, tag = 'internal scratch']
  #allocation2 [shape = 'f32[3,8,128]{2,1,0:T(8,128)}', space=vmem, size = 0x3000, scoped, tag = 'scratch operand']
  %s0 = inlined_call_operand.hbm [shape: f32[16,128], index: 0, kind: input, shape index: {}]
  %s1 = inlined_call_operand.hbm [shape: f32[16,128], index: 1, kind: input, shape index: {}]
  %s2 = inlined_call_operand.hbm [shape: f32[1,3,8,128], index: 2, kind: output, shape index: {}]
  %s3 = sld [smem:[#allocation0]]
  $region34: #{tpu_custom_call.1} parent=0
    _
  %s5 = ssub.s32 1, %s3
  %s6 = scalar_select 0, %s5, %s3
  $region1: #{tpu_custom_call.1} parent=0
    #allocation3 [shape = 'u8[8192]{0}', space=vmem, size = 0x2000, scoped, tag = 'input window, operand 0, single buffered']
    #allocation4 [shape = 's32[1]{0}', space=sflag, size = 0x4, scoped, tag = 'scoped memory for tpu_custom_call.1']
    #allocation5 [shape = 's32[1]{0}', space=sflag, size = 0x4, scoped, tag = 'scoped memory for tpu_custom_call.1']
    #allocation6 [shape = 'u8[8192]{0}', space=vmem, size = 0x2000, scoped, tag = 'input window, operand 1, single buffered']
    #allocation7 [shape = 's32[1]{0}', space=sflag, size = 0x4, scoped, tag = 'scoped memory for tpu_custom_call.1']
    #allocation8 [shape = 'u8[12288]{0}', space=vmem, size = 0x3000, scoped, tag = 'output window, operand 0, single buffered']
    %7 = vsyncpa [#allocation4], 0
    %8 = vsyncpa [#allocation7], 0
    %9 = vsyncpa [#allocation5], 0
    // Predicated region
    $region2: #{tpu_custom_call.1} parent=1 // pred_check
      _
    $region3: #{tpu_custom_call.1} parent=1 // pred_check_branch
      %11 = sbr.rel (0) target = $region5
    $region4: #{tpu_custom_call.1} parent=1 // pred_region
      %s12 = sadd.s32 0, 0
      %p13 = scmp.lt.s32.totalorder %s12, 0
      %s14 = scalar_select %p13, %s12, 0
      %s15 = smul.u32 2, %s14
      %s17 = ssub.s32 256, 256
      %18 = vsyncadd [#allocation4], %s17
      %s19 = smul.addr %s15, 128
      %s20 = scalar_lea.hbm %s0, %s19
      %s21 = sshll.u32 [#allocation3], 4
      %s22 = int_to_ptr.vmem [resolvable:$true] %s21
      %27 = dma.hbm_to_vmem [thread:$0]  %s20, 256, %s22, [#allocation4], 128, 128, 8
    $region5: #{tpu_custom_call.1} parent=1 // pred_fallthru
      _
    // Predicated region
    $region6: #{tpu_custom_call.1} parent=1 // pred_check
      _
    $region7: #{tpu_custom_call.1} parent=1 // pred_check_branch
      %29 = sbr.rel (0) target = $region9
    $region8: #{tpu_custom_call.1} parent=1 // pred_region
      %s30 = sadd.s32 0, 0
      %p31 = scmp.lt.s32.totalorder %s30, 0
      %s32 = scalar_select %p31, %s30, 0
      %s33 = smul.u32 2, %s32
      %s35 = ssub.s32 256, 256
      %36 = vsyncadd [#allocation7], %s35
      %s37 = smul.addr %s33, 128
      %s38 = scalar_lea.hbm %s1, %s37
      %s39 = sshll.u32 [#allocation6], 4
      %s40 = int_to_ptr.vmem [resolvable:$true] %s39
      %45 = dma.hbm_to_vmem [thread:$0]  %s38, 256, %s40, [#allocation7], 128, 128, 8
    $region9: #{tpu_custom_call.1} parent=1 // pred_fallthru
      _
    // Predicated region
    $region10: #{tpu_custom_call.1} parent=1 // pred_check
      _
    $region11: #{tpu_custom_call.1} parent=1 // pred_check_branch
      %47 = sbr.rel (0) target = $region13
    $region12: #{tpu_custom_call.1} parent=1 // pred_region
      %48 = dma.done [#allocation4], 256
    $region13: #{tpu_custom_call.1} parent=1 // pred_fallthru
      _
    // Predicated region
    $region14: #{tpu_custom_call.1} parent=1 // pred_check
      _
    $region15: #{tpu_custom_call.1} parent=1 // pred_check_branch
      %50 = sbr.rel (0) target = $region17
    $region16: #{tpu_custom_call.1} parent=1 // pred_region
      %51 = dma.done [#allocation7], 256
    $region17: #{tpu_custom_call.1} parent=1 // pred_fallthru
      _
    %s52 = sadd.s32 0, 0
    %p53 = scmp.lt.s32.totalorder %s52, 0
    %s54 = scalar_select %p53, %s52, 0
    %s55 = smul.u32 2, %s54
    %s56 = sadd.s32 0, 0
    %p57 = scmp.lt.s32.totalorder %s56, 0
    %s58 = scalar_select %p57, %s56, 0
    %s59 = smul.u32 2, %s58
    %p60 = scmp.eq.s32.totalorder 0, 0
    // Predicated region
    $region18: #{tpu_custom_call.1} parent=1 // pred_check
      %p61 = pneg %p60
    $region19: #{tpu_custom_call.1} parent=1 // pred_check_branch
      %63 = sbr.rel (%p61) target = $region21
    $region20: #{tpu_custom_call.1} parent=1 // pred_region
      %64 = vst [vmem:[#allocation2] sm:$0xff] 0.0
      %65 = vst [vmem:[#allocation2 + $0x8] sm:$0xff] 0.0
      %66 = vst [vmem:[#allocation2 + $0x10] sm:$0xff] 0.0
    $region21: #{tpu_custom_call.1} parent=1 // pred_fallthru
      _
    %v67 = vld [vmem:[#allocation3] sm:$0xff]
    %v68 = vld [vmem:[#allocation3 + $0x8] sm:$0xff]
    %v69 = vld [vmem:[#allocation6] sm:$0xff]
    %v70 = vld [vmem:[#allocation6 + $0x8] sm:$0xff]
    %v71 = vlog2.pop %v67
    %v72 = vmul.f32 %v71, 0.6931472
    %v73 = vlog2.pop %v68
    %v74 = vmul.f32 %v73, 0.6931472
    %v75 = vmax.f32 %v72, -100.0
    %v76 = vmax.f32 %v74, -100.0
    %v77 = vsub.f32 1.0, %v67
    %v78 = vsub.f32 1.0, %v68
    %v79 = vlog2.pop %v77
    %v80 = vmul.f32 %v79, 0.6931472
    %v81 = vlog2.pop %v78
    %v82 = vmul.f32 %v81, 0.6931472
    %v83 = vmax.f32 %v80, -100.0
    %v84 = vmax.f32 %v82, -100.0
    %v85 = vmul.f32 %v69, %v75
    %v86 = vmul.f32 %v70, %v76
    %v87 = vsub.f32 1.0, %v69
    %v88 = vsub.f32 1.0, %v70
    %v89 = vmul.f32 %v87, %v83
    %v90 = vmul.f32 %v88, %v84
    %v91 = vadd.f32 %v85, %v89
    %v92 = vadd.f32 %v86, %v90
    %v93 = vsub.f32 0.0, %v91
    %v94 = vsub.f32 0.0, %v92
    %v95 = vld [vmem:[#allocation2] sm:$0xff]
    %v96 = vadd.f32 %v69, %v70
    %v97 = vadd.f32 %v95, %v96
    %98 = vst [vmem:[#allocation2] sm:$0xff] %v97
    %s99 = scalar_lea.vmem [#allocation2], 8
    %v100 = vld [vmem:[%s99] sm:$0xff]
    %v101 = vadd.f32 %v93, %v94
    %v102 = vadd.f32 %v100, %v101
    %103 = vst [vmem:[%s99] sm:$0xff] %v102
    %s104 = scalar_lea.vmem [#allocation2], 16
    %v105 = vld [vmem:[%s104] sm:$0xff]
    %v106 = vmul.f32 %v69, %v93
    %v107 = vmul.f32 %v70, %v94
    %v108 = vadd.f32 %v106, %v107
    %v109 = vadd.f32 %v105, %v108
    %110 = vst [vmem:[%s104] sm:$0xff] %v109
    // Predicated region
    $region22: #{tpu_custom_call.1} parent=1 // pred_check
      %p111 = pneg %p60
    $region23: #{tpu_custom_call.1} parent=1 // pred_check_branch
      %113 = sbr.rel (%p111) target = $region25
    $region24: #{tpu_custom_call.1} parent=1 // pred_region
      %v114 = vld [vmem:[#allocation2] sm:$0xff]
      %v115 = vld [vmem:[#allocation2 + $0x8] sm:$0xff]
      %v116 = vld [vmem:[#allocation2 + $0x10] sm:$0xff]
      %117 = vst [vmem:[#allocation8] sm:$0xff] %v114
      %118 = vst [vmem:[#allocation8 + $0x8] sm:$0xff] %v115
      %119 = vst [vmem:[#allocation8 + $0x10] sm:$0xff] %v116
    $region25: #{tpu_custom_call.1} parent=1 // pred_fallthru
      _
    // Predicated region
    $region26: #{tpu_custom_call.1} parent=1 // pred_check
      _
    $region27: #{tpu_custom_call.1} parent=1 // pred_check_branch
      %121 = sbr.rel (0) target = $region29
    $region28: #{tpu_custom_call.1} parent=1 // pred_region
      %s123 = ssub.s32 384, 384
      %124 = vsyncadd [#allocation5], %s123
      %s125 = sshll.u32 [#allocation8], 4
      %s126 = int_to_ptr.vmem [resolvable:$true] %s125
      %131 = dma.vmem_to_hbm [thread:$0]  %s126, 384, %s2, [#allocation5], 128, 128, 8
    $region29: #{tpu_custom_call.1} parent=1 // pred_fallthru
      _
    // Predicated region
    $region30: #{tpu_custom_call.1} parent=1 // pred_check
      _
    $region31: #{tpu_custom_call.1} parent=1 // pred_check_branch
      %133 = sbr.rel (0) target = $region33
    $region32: #{tpu_custom_call.1} parent=1 // pred_region
      %134 = dma.done [#allocation5], 384
    $region33: #{tpu_custom_call.1} parent=1 // pred_fallthru
      _
    %135 = vsyncpa [#allocation4], 1
    %136 = vsyncpa [#allocation7], 1
    %137 = vsyncpa [#allocation5], 1

</llo_original>
